<compile_context>
chip_gen: v5e
topology: v5e:2x2
jax: 0.10.0
libtpu: 0.0.40
codegen_flags: <defaults>
</compile_context>

<pallas_src>
import functools
import math

import jax
import jax.numpy as jnp
from jax.experimental import pallas as pl
from jax.experimental.pallas import tpu as pltpu

GAMMA = 1.5
ALPHA = 0.25
LANES = 128
SUBLANES = 8
_PAD_SENTINEL = -1e4   # exp(-1e4) == 0 and sigmoid(-1e4) == 0 -> padded loss == 0 exactly


def _cdiv(a, b):
    return (a + b - 1) // b


def _round_up(a, b):
    return _cdiv(a, b) * b


def _sublane_granule(dtype):
    # Native (sublane, lane) tile: f32 -> (8,128), bf16/f16 -> (16,128), int8/fp8 -> (32,128)
    return {4: 8, 2: 16, 1: 32}.get(jnp.dtype(dtype).itemsize, 8)


def _pow_gamma(m, gamma):
    if gamma == 1.5:
        return m * jnp.sqrt(m)
    if gamma == 2.0:
        return m * m
    if gamma == 1.0:
        return m
    # TODO(synk): general (non 1/1.5/2) gamma falls back to pow = exp(g*log(m)).
    return jnp.power(m, gamma)


def _focal_loss_kernel(pred_ref, true_ref, out_ref, *,
                       tile_rows, steps, valid_rows, needs_mask, gamma, alpha):
    c = pl.program_id(0)   # chunk ("parallel" / CORE_PARALLEL) axis
    i = pl.program_id(1)   # reduction ("arbitrary") axis within the chunk

    @pl.when(i == 0)
    def _():
        out_ref[...] = jnp.zeros_like(out_ref)

    # Upcast on load: inputs stay in native dtype in HBM (half the DMA bytes
    # for bf16/f16); the cast is free on the VPU.
    x = pred_ref[...].astype(jnp.float32)   # logits
    z = true_ref[...].astype(jnp.float32)   # targets

    # BCEWithLogitsLoss(reduction='none'), numerically stable:
    #   max(x, 0) - x*z + log1p(exp(-|x|))
    e = jnp.exp(-jnp.abs(x))
    bce = jnp.maximum(x, 0.0) - x * z + jnp.log1p(e)

    # sigmoid(x) reusing e = exp(-|x|):  x>=0 -> 1/(1+e),  x<0 -> e/(1+e)
    inv = pl.reciprocal(1.0 + e, approx=False)
    p = inv * jnp.where(x >= 0.0, 1.0, e)

    # m = 1 - p_t  with  p_t = z*p + (1-z)*(1-p)   =>   m = p + z - 2*p*z
    m = p + z - 2.0 * p * z
    # alpha_factor = z*alpha + (1-z)*(1-alpha)
    alpha_factor = (1.0 - alpha) + (2.0 * alpha - 1.0) * z
    loss = bce * alpha_factor * _pow_gamma(m, gamma)

    if needs_mask:
        # Row-granularity validity mask. Only compiled in when the grid
        # coverage overshoots the padded row count (lane/row tail padding is
        # already exact-zero via the sentinel). Uses LOGICAL row indices, so
        # it also neutralizes blocks whose index_map was clamped.
        row0 = (c * steps + i) * tile_rows
        rid = row0 + jax.lax.broadcasted_iota(jnp.int32, (tile_rows, 1), 0)
        loss = jnp.where(rid < valid_rows, loss, 0.0)

    # Vreg-shaped partial sum: fold groups of 8 sublanes (pure VPU adds) into
    # the chunk's resident (8,128) f32 accumulator block.
    partial = jnp.sum(loss.reshape(tile_rows // SUBLANES, SUBLANES, LANES), axis=0)
    out_ref[...] += partial


def focal_loss_mean(pred, true, *, gamma=GAMMA, alpha=ALPHA,
                    max_tile_rows=2048, num_chunks=1, core_parallel=False):
    """FocalLoss(BCEWithLogitsLoss(reduction='mean'), gamma, alpha).

    num_chunks>1 + core_parallel=True is the v7x (2 TensorCore) path;
    defaults target single-TC v5e/v6e. max_tile_rows=2048 keeps the pipeline
    at ~4 MiB of double-buffered f32 input (safe under every default scoped
    VMEM limit); raise to 4096-8192 on v7x together with vmem_limit_bytes.
    """
    assert pred.shape == true.shape
    total = int(math.prod(pred.shape))

    def as_float(a):
        return a if jnp.issubdtype(a.dtype, jnp.floating) else a.astype(jnp.float32)

    pred_flat = as_float(pred).reshape(-1)   # reshape of contiguous array: no copy
    true_flat = as_float(true).reshape(-1)

    granule = max(_sublane_granule(pred_flat.dtype), _sublane_granule(true_flat.dtype))
    rows = _cdiv(total, LANES)
    rows_padded = _round_up(max(rows, granule), granule)
    pad = rows_padded * LANES - total
    if pad:
        # Tiny pad (< granule*128 elements). Sentinel logits + zero targets
        # make padded elements contribute exactly 0 to the sum, so no
        # in-kernel mask is needed for this tail. When total is already a
        # multiple of granule*128 (common), there is NO pad copy at all.
        pred_flat = jnp.pad(pred_flat, (0, pad), constant_values=_PAD_SENTINEL)
        true_flat = jnp.pad(true_flat, (0, pad), constant_values=0)
    pred2d = pred_flat.reshape(rows_padded, LANES)
    true2d = true_flat.reshape(rows_padded, LANES)

    # Tile / grid sizing.
    num_chunks = max(1, min(num_chunks, rows_padded // granule))
    tile_rows = min(_round_up(max_tile_rows, granule),
                    _round_up(_cdiv(rows_padded, num_chunks), granule))
    steps = _cdiv(rows_padded, num_chunks * tile_rows)
    coverage = num_chunks * steps * tile_rows
    needs_mask = coverage > rows_padded

    if needs_mask:
        last_block = (rows_padded - 1) // tile_rows
        def in_index_map(c, i):
            # Clamp so no block is ever fully out of bounds; logically-OOB
            # rows are zeroed by the in-kernel row mask.
            return (jnp.minimum(c * steps + i, last_block), 0)
    else:
        def in_index_map(c, i):
            return (c * steps + i, 0)

    kernel = functools.partial(
        _focal_loss_kernel,
        tile_rows=tile_rows, steps=steps, valid_rows=rows_padded,
        needs_mask=needs_mask, gamma=gamma, alpha=alpha)

    if core_parallel:
        dims = (pltpu.CORE_PARALLEL, pltpu.ARBITRARY)   # v7x: shard chunks across TCs
    else:
        dims = ("parallel", "arbitrary")

    in_bytes = pred2d.dtype.itemsize + true2d.dtype.itemsize

    partials = pl.pallas_call(
        kernel,
        out_shape=jax.ShapeDtypeStruct((num_chunks * SUBLANES, LANES), jnp.float32),
        grid_spec=pltpu.PrefetchScalarGridSpec(
            num_scalar_prefetch=0,
            grid=(num_chunks, steps),
            in_specs=[
                pl.BlockSpec((tile_rows, LANES), in_index_map),
                pl.BlockSpec((tile_rows, LANES), in_index_map),
            ],
            # One (8,128) accumulator block per chunk, resident across steps.
            out_specs=pl.BlockSpec((SUBLANES, LANES), lambda c, i: (c, 0)),
        ),
        compiler_params=pltpu.CompilerParams(dimension_semantics=dims),
        cost_estimate=pl.CostEstimate(
            flops=16 * rows_padded * LANES,
            transcendentals=4 * rows_padded * LANES,
            bytes_accessed=in_bytes * rows_padded * LANES
                           + 4 * num_chunks * SUBLANES * LANES,
        ),
    )(pred2d, true2d)

    # Tiny cross-chunk / cross-lane reduction + mean in plain JAX.
    return jnp.sum(partials) / jnp.float32(total)


def _focal_loss_ref(pred, true, gamma=GAMMA, alpha=ALPHA):
    x = pred.astype(jnp.float32)
    z = true.astype(jnp.float32)
    bce = jnp.maximum(x, 0.0) - x * z + jnp.log1p(jnp.exp(-jnp.abs(x)))
    p = jax.nn.sigmoid(x)
    p_t = z * p + (1 - z) * (1 - p)
    alpha_factor = z * alpha + (1 - z) * (1 - alpha)
    mod = (1.0 - p_t) ** gamma
    return jnp.mean(bce * alpha_factor * mod)


if __name__ == "__main__":
    key = jax.random.PRNGKey(0)
    keys = jax.random.split(key, 8)

    # 1) NCHW logits, nicely sized (no pad, no mask).
    pred = jax.random.normal(keys[0], (2, 4, 16, 16), dtype=jnp.float32) * 2.0
    true = (jax.random.uniform(keys[1], (2, 4, 16, 16)) > 0.7).astype(jnp.float32)
    out = jax.block_until_ready(focal_loss_mean(pred, true))
    ref = _focal_loss_ref(pred, true)
    assert jnp.allclose(out, ref, rtol=1e-5, atol=1e-7), (out, ref)

    # 2) Odd-sized input: exercises the sentinel tail padding.
    pred_odd = jax.random.normal(keys[2], (3, 5, 7, 11), dtype=jnp.float32) * 2.0
    true_odd = (jax.random.uniform(keys[3], (3, 5, 7, 11)) > 0.7).astype(jnp.float32)
    out_odd = jax.block_until_ready(focal_loss_mean(pred_odd, true_odd))
    ref_odd = _focal_loss_ref(pred_odd, true_odd)
    assert jnp.allclose(out_odd, ref_odd, rtol=1e-5, atol=1e-7), (out_odd, ref_odd)

    # 3) Ragged grid coverage + multi-chunk: exercises the clamped index_map
    #    and the row-granularity mask path.
    pred_r = jax.random.normal(keys[4], (5, 1024), dtype=jnp.float32)
    true_r = (jax.random.uniform(keys[5], (5, 1024)) > 0.7).astype(jnp.float32)
    out_r = jax.block_until_ready(
        focal_loss_mean(pred_r, true_r, max_tile_rows=16, num_chunks=2))
    ref_r = _focal_loss_ref(pred_r, true_r)
    assert jnp.allclose(out_r, ref_r, rtol=1e-5, atol=1e-7), (out_r, ref_r)

    # 4) Native bf16 inputs: kernel upcasts on load (halves HBM traffic).
    pred_bf = (jax.random.normal(keys[6], (2, 4, 16, 16)) * 2.0).astype(jnp.bfloat16)
    true_bf = (jax.random.uniform(keys[7], (2, 4, 16, 16)) > 0.7).astype(jnp.bfloat16)
    out_bf = jax.block_until_ready(focal_loss_mean(pred_bf, true_bf))
    ref_bf = _focal_loss_ref(pred_bf, true_bf)
    assert jnp.allclose(out_bf, ref_bf, rtol=1e-5, atol=1e-7), (out_bf, ref_bf)

    print("KERNEL_OK")
</pallas_src>

<mosaic_0001>
module attributes {stable_mosaic.version = 11 : i64} {
  func.func @_focal_loss_kernel(%arg0: i32, %arg1: i32, %arg2: memref<16x128xf32, #tpu.memory_space<vmem>>, %arg3: memref<16x128xf32, #tpu.memory_space<vmem>>, %arg4: memref<8x128xf32, #tpu.memory_space<vmem>>) attributes {dimension_semantics = [#tpu.dimension_semantics<parallel>, #tpu.dimension_semantics<arbitrary>], iteration_bounds = array<i64: 1, 1>, scalar_prefetch = 0 : i64, scratch_operands = 0 : i64, tpu.core_type = #tpu.core_type<tc>, window_params = [{transform_indices = @transform_0, window_bounds = array<i64: 16, 128>}, {transform_indices = @transform_1, window_bounds = array<i64: 16, 128>}, {transform_indices = @transform_2, window_bounds = array<i64: 8, 128>}]} {
    %c0_i32 = arith.constant 0 : i32
    %0 = arith.cmpi eq, %arg1, %c0_i32 : i32
    %1 = arith.extui %0 : i1 to i32
    %c0_i32_0 = arith.constant 0 : i32
    %2 = arith.cmpi ne, %1, %c0_i32_0 : i32
    scf.if %2 {
      %cst_16 = arith.constant 0.000000e+00 : f32
      %41 = vector.broadcast %cst_16 : f32 to vector<8x128xf32>
      %c0_17 = arith.constant 0 : index
      %c0_18 = arith.constant 0 : index
      %42 = vector.load %arg4[%c0_17, %c0_18] : memref<8x128xf32, #tpu.memory_space<vmem>>, vector<8x128xf32>
      tpu.vector_store %arg4[%c0_17, %c0_18], %41 {strides = array<i32>} : memref<8x128xf32, #tpu.memory_space<vmem>>, vector<8x128xf32>,
    } else {
    }
    %c0 = arith.constant 0 : index
    %c0_1 = arith.constant 0 : index
    %3 = vector.load %arg2[%c0, %c0_1] : memref<16x128xf32, #tpu.memory_space<vmem>>, vector<16x128xf32>
    %c0_2 = arith.constant 0 : index
    %c0_3 = arith.constant 0 : index
    %4 = vector.load %arg3[%c0_2, %c0_3] : memref<16x128xf32, #tpu.memory_space<vmem>>, vector<16x128xf32>
    %5 = math.absf %3 : vector<16x128xf32>
    %cst = arith.constant 0.000000e+00 : f32
    %6 = vector.broadcast %cst : f32 to vector<16x128xf32>
    %7 = arith.subf %6, %5 : vector<16x128xf32>
    %8 = math.exp %7 : vector<16x128xf32>
    %cst_4 = arith.constant 0.000000e+00 : f32
    %9 = vector.broadcast %cst_4 : f32 to vector<16x128xf32>
    %10 = arith.maximumf %3, %9 : vector<16x128xf32>
    %11 = arith.mulf %3, %4 : vector<16x128xf32>
    %12 = arith.subf %10, %11 : vector<16x128xf32>
    %13 = math.log1p %8 : vector<16x128xf32>
    %14 = arith.addf %12, %13 : vector<16x128xf32>
    %cst_5 = arith.constant 1.000000e+00 : f32
    %15 = vector.broadcast %cst_5 : f32 to vector<16x128xf32>
    %16 = arith.addf %15, %8 : vector<16x128xf32>
    %17 = tpu.reciprocal %16 : vector<16x128xf32> -> vector<16x128xf32>
    %cst_6 = arith.constant 0.000000e+00 : f32
    %18 = vector.broadcast %cst_6 : f32 to vector<16x128xf32>
    %19 = arith.cmpf oge, %3, %18 : vector<16x128xf32>
    %cst_7 = arith.constant 1.000000e+00 : f32
    %20 = vector.broadcast %cst_7 : f32 to vector<16x128xf32>
    %21 = arith.select %19, %20, %8 : vector<16x128xi1>, vector<16x128xf32>
    %22 = arith.mulf %17, %21 : vector<16x128xf32>
    %23 = arith.addf %22, %4 : vector<16x128xf32>
    %cst_8 = arith.constant 2.000000e+00 : f32
    %24 = vector.broadcast %cst_8 : f32 to vector<16x128xf32>
    %25 = arith.mulf %24, %22 : vector<16x128xf32>
    %26 = arith.mulf %25, %4 : vector<16x128xf32>
    %27 = arith.subf %23, %26 : vector<16x128xf32>
    %cst_9 = arith.constant -5.000000e-01 : f32
    %28 = vector.broadcast %cst_9 : f32 to vector<16x128xf32>
    %29 = arith.mulf %28, %4 : vector<16x128xf32>
    %cst_10 = arith.constant 7.500000e-01 : f32
    %30 = vector.broadcast %cst_10 : f32 to vector<16x128xf32>
    %31 = arith.addf %30, %29 : vector<16x128xf32>
    %32 = arith.mulf %14, %31 : vector<16x128xf32>
    %33 = math.sqrt %27 : vector<16x128xf32>
    %34 = arith.mulf %27, %33 : vector<16x128xf32>
    %35 = arith.mulf %32, %34 : vector<16x128xf32>
    %36 = vector.shape_cast %35 : vector<16x128xf32> to vector<2x8x128xf32>
    %cst_11 = arith.constant dense<0.000000e+00> : vector<8x128xf32>
    %37 = vector.multi_reduction <add>, %36, %cst_11 [0] : vector<2x8x128xf32> to vector<8x128xf32>
    %c0_12 = arith.constant 0 : index
    %c0_13 = arith.constant 0 : index
    %38 = vector.load %arg4[%c0_12, %c0_13] : memref<8x128xf32, #tpu.memory_space<vmem>>, vector<8x128xf32>
    %39 = arith.addf %38, %37 : vector<8x128xf32>
    %c0_14 = arith.constant 0 : index
    %c0_15 = arith.constant 0 : index
    %40 = vector.load %arg4[%c0_14, %c0_15] : memref<8x128xf32, #tpu.memory_space<vmem>>, vector<8x128xf32>
    tpu.vector_store %arg4[%c0_14, %c0_15], %39 {strides = array<i32>} : memref<8x128xf32, #tpu.memory_space<vmem>>, vector<8x128xf32>,
    return
  }
  func.func @transform_0(%arg0: i32, %arg1: i32) -> (i32, i32) {
    %c1_i32 = arith.constant 1 : i32
    %0 = arith.muli %arg0, %c1_i32 : i32
    %1 = arith.addi %0, %arg1 : i32
    %c0_i32 = arith.constant 0 : i32
    %c0_i32_0 = arith.constant 0 : i32
    return %1, %c0_i32 : i32, i32
  }
  func.func @transform_1(%arg0: i32, %arg1: i32) -> (i32, i32) {
    %c1_i32 = arith.constant 1 : i32
    %0 = arith.muli %arg0, %c1_i32 : i32
    %1 = arith.addi %0, %arg1 : i32
    %c0_i32 = arith.constant 0 : i32
    %c0_i32_0 = arith.constant 0 : i32
    return %1, %c0_i32 : i32, i32
  }
  func.func @transform_2(%arg0: i32, %arg1: i32) -> (i32, i32) {
    %c0_i32 = arith.constant 0 : i32
    %c0_i32_0 = arith.constant 0 : i32
    return %arg0, %c0_i32 : i32, i32
  }
}

</mosaic_0001>

<llo_original>
// kernel: tpu_custom_call.1
$region0: #{tpu_custom_call.1}
  #allocation0 [shape = 'u32[]', space=smem, size = 0x4, offset = 0x4, fixed_abs, tag = 'smem constant byte address 0x4 - core index']
  #allocation1 [shape = 'u32[72,128]{1,0:T(1,128)}', space=vmem, size = 0x9000, scoped, tag = 'internal scratch']
  %s0 = inlined_call_operand.hbm [shape: f32[16,128], index: 0, kind: input, shape index: {}]
  %s1 = inlined_call_operand.hbm [shape: f32[16,128], index: 1, kind: input, shape index: {}]
  %s2 = inlined_call_operand.hbm [shape: f32[8,128], index: 2, kind: output, shape index: {}]
  %s3 = sld [smem:[#allocation0]]
  $region30: #{tpu_custom_call.1} parent=0
    _
  %s5 = ssub.s32 1, %s3
  %s6 = scalar_select 0, %s5, %s3
  $region1: #{tpu_custom_call.1} parent=0
    #allocation2 [shape = 'u8[8192]{0}', space=vmem, size = 0x2000, scoped, tag = 'input window, operand 0, single buffered']
    #allocation3 [shape = 's32[1]{0}', space=sflag, size = 0x4, scoped, tag = 'scoped memory for tpu_custom_call.1']
    #allocation4 [shape = 's32[1]{0}', space=sflag, size = 0x4, scoped, tag = 'scoped memory for tpu_custom_call.1']
    #allocation5 [shape = 'u8[8192]{0}', space=vmem, size = 0x2000, scoped, tag = 'input window, operand 1, single buffered']
    #allocation6 [shape = 's32[1]{0}', space=sflag, size = 0x4, scoped, tag = 'scoped memory for tpu_custom_call.1']
    #allocation7 [shape = 'u8[4096]{0}', space=vmem, size = 0x1000, scoped, tag = 'output window, operand 0, single buffered']
    %7 = vsyncpa [#allocation3], 0
    %8 = vsyncpa [#allocation6], 0
    %9 = vsyncpa [#allocation4], 0
    // Predicated region
    $region2: #{tpu_custom_call.1} parent=1 // pred_check
      _
    $region3: #{tpu_custom_call.1} parent=1 // pred_check_branch
      %11 = sbr.rel (0) target = $region5
    $region4: #{tpu_custom_call.1} parent=1 // pred_region
      %s12 = sadd.s32 0, 0
      %s13 = smul.u32 2, %s12
      %15 = vsyncadd [#allocation3], 0
      %s16 = smul.addr %s13, 8
      %s17 = scalar_lea.hbm %s0, %s16
      %s18 = sshll.u32 %s17, 4
      %s19 = int_to_ptr.hbm [resolvable:$true] %s18
      %s20 = sshll.u32 [#allocation2], 4
      %s21 = int_to_ptr.vmem [resolvable:$true] %s20
      %26 = dma.hbm_to_vmem [thread:$0]  %s19, 256, %s21, [#allocation3], 128, 128, 8
    $region5: #{tpu_custom_call.1} parent=1 // pred_fallthru
      _
    // Predicated region
    $region6: #{tpu_custom_call.1} parent=1 // pred_check
      _
    $region7: #{tpu_custom_call.1} parent=1 // pred_check_branch
      %28 = sbr.rel (0) target = $region9
    $region8: #{tpu_custom_call.1} parent=1 // pred_region
      %s29 = sadd.s32 0, 0
      %s30 = smul.u32 2, %s29
      %32 = vsyncadd [#allocation6], 0
      %s33 = smul.addr %s30, 8
      %s34 = scalar_lea.hbm %s1, %s33
      %s35 = sshll.u32 %s34, 4
      %s36 = int_to_ptr.hbm [resolvable:$true] %s35
      %s37 = sshll.u32 [#allocation5], 4
      %s38 = int_to_ptr.vmem [resolvable:$true] %s37
      %43 = dma.hbm_to_vmem [thread:$0]  %s36, 256, %s38, [#allocation6], 128, 128, 8
    $region9: #{tpu_custom_call.1} parent=1 // pred_fallthru
      _
    // Predicated region
    $region10: #{tpu_custom_call.1} parent=1 // pred_check
      _
    $region11: #{tpu_custom_call.1} parent=1 // pred_check_branch
      %45 = sbr.rel (0) target = $region13
    $region12: #{tpu_custom_call.1} parent=1 // pred_region
      %47 = dma.done [#allocation3], 256
    $region13: #{tpu_custom_call.1} parent=1 // pred_fallthru
      _
    // Predicated region
    $region14: #{tpu_custom_call.1} parent=1 // pred_check
      _
    $region15: #{tpu_custom_call.1} parent=1 // pred_check_branch
      %49 = sbr.rel (0) target = $region17
    $region16: #{tpu_custom_call.1} parent=1 // pred_region
      %51 = dma.done [#allocation6], 256
    $region17: #{tpu_custom_call.1} parent=1 // pred_fallthru
      _
    %s52 = sadd.s32 0, 0
    %s53 = smul.u32 2, %s52
    %s54 = sadd.s32 0, 0
    %s55 = smul.u32 2, %s54
    %p56 = scmp.eq.s32.totalorder 0, 0
    // Predicated region
    $region18: #{tpu_custom_call.1} parent=1 // pred_check
      %p57 = pneg %p56
    $region19: #{tpu_custom_call.1} parent=1 // pred_check_branch
      %59 = sbr.rel (%p57) target = $region21
    $region20: #{tpu_custom_call.1} parent=1 // pred_region
      %60 = vst [vmem:[#allocation7] sm:$0xff] 0.0
    $region21: #{tpu_custom_call.1} parent=1 // pred_fallthru
      _
    %v61 = vld [vmem:[#allocation2] sm:$0xff]
    %v62 = vld [vmem:[#allocation2 + $0x8] sm:$0xff]
    %v63 = vld [vmem:[#allocation5] sm:$0xff]
    %v64 = vld [vmem:[#allocation5 + $0x8] sm:$0xff]
    %v65 = vand.u32 2147483647, %v61
    %v66 = vand.u32 2147483647, %v62
    %v67 = vsub.f32 0.0, %v65
    %v68 = vsub.f32 0.0, %v66
    %v69 = vmul.f32 %v67, 1.442695
    %v70 = vpow.pop %v69
    %v71 = vmul.f32 %v68, 1.442695
    %v72 = vpow.pop %v71
    %v73 = vmax.f32 %v61, 0.0
    %v74 = vmax.f32 %v62, 0.0
    %v75 = vmul.f32 %v61, %v63
    %v76 = vmul.f32 %v62, %v64
    %v77 = vsub.f32 %v73, %v75
    %v78 = vsub.f32 %v74, %v76
    %v79 = vadd.f32 %v70, 1.0
    %v80 = vlog2.pop %v79
    %v81 = vmul.f32 %v80, 0.6931472
    %v82 = vmul.f32 -0.5, %v70
    %v83 = vadd.f32 %v82, 1.0
    %v84 = vmul.f32 %v83, %v70
    %v85 = vand.u32 2147483647, %v70
    %vm86 = vcmp.lt.f32.partialorder %v85, 0.0004427343
    %v87 = vsel %vm86, %v84, %v81
    %v88 = vadd.f32 %v72, 1.0
    %v89 = vlog2.pop %v88
    %v90 = vmul.f32 %v89, 0.6931472
    %v91 = vmul.f32 -0.5, %v72
    %v92 = vadd.f32 %v91, 1.0
    %v93 = vmul.f32 %v92, %v72
    %v94 = vand.u32 2147483647, %v72
    %vm95 = vcmp.lt.f32.partialorder %v94, 0.0004427343
    %v96 = vsel %vm95, %v93, %v90
    %v97 = vadd.f32 %v77, %v87
    %v98 = vadd.f32 %v78, %v96
    %v99 = vadd.f32 %v70, 1.0
    %v100 = vadd.f32 %v72, 1.0
    %v101 = vrcp.pop %v99
    %v102 = vmul.f32 %v99, %v101
    %v103 = vsub.f32 1.0, %v102
    %v104 = vmul.f32 %v101, %v103
    %v105 = vadd.f32 %v101, %v104
    %vm106 = vweird.f32 %v99
    %vm107 = vweird.f32 %v101
    %vm108 = vmor %vm106, %vm107
    %v109 = vsel %vm108, %v101, %v105
    %v110 = vand.u32 2147483647, %v99
    %vm111 = vcmp.eq.f32.partialorder %v110, 8.507059e+37
    %v112 = vand.u32 %v99, 2147483648
    %v113 = vor.u32 1.1754944e-38, %v112
    %v114 = vsel %vm111, %v113, %v109
    %v115 = vrcp.pop %v100
    %v116 = vmul.f32 %v100, %v115
    %v117 = vsub.f32 1.0, %v116
    %v118 = vmul.f32 %v115, %v117
    %v119 = vadd.f32 %v115, %v118
    %vm120 = vweird.f32 %v100
    %vm121 = vweird.f32 %v115
    %vm122 = vmor %vm120, %vm121
    %v123 = vsel %vm122, %v115, %v119
    %v124 = vand.u32 2147483647, %v100
    %vm125 = vcmp.eq.f32.partialorder %v124, 8.507059e+37
    %v126 = vand.u32 %v100, 2147483648
    %v127 = vor.u32 1.1754944e-38, %v126
    %v128 = vsel %vm125, %v127, %v123
    %vm129 = vcmp.ge.f32.partialorder %v61, 0.0
    %vm130 = vcmp.ge.f32.partialorder %v62, 0.0
    %v131 = vsel %vm129, 1.0, %v70
    %v132 = vsel %vm130, 1.0, %v72
    %v133 = vmul.f32 %v114, %v131
    %v134 = vmul.f32 %v128, %v132
    %v135 = vadd.f32 %v133, %v63
    %v136 = vadd.f32 %v134, %v64
    %v137 = vmul.f32 %v133, 2.0
    %v138 = vmul.f32 %v134, 2.0
    %v139 = vmul.f32 %v137, %v63
    %v140 = vmul.f32 %v138, %v64
    %v141 = vsub.f32 %v135, %v139
    %v142 = vsub.f32 %v136, %v140
    %v143 = vmul.f32 %v63, -0.5
    %v144 = vmul.f32 %v64, -0.5
    %v145 = vadd.f32 %v143, 0.75
    %v146 = vadd.f32 %v144, 0.75
    %v147 = vmul.f32 %v97, %v145
    %v148 = vmul.f32 %v98, %v146
    %v149 = vrsqrt.pop %v141
    %v150 = vmul.f32 %v149, %v141
    %v151 = vmul.f32 %v150, %v149
    %v152 = vmul.f32 0.5, %v151
    %v153 = vsub.f32 1.5, %v152
    %v154 = vmul.f32 %v149, %v153
    %v155 = vmul.f32 %v141, %v154
    %vm156 = vcmp.eq.f32.partialorder %v141, inf
    %v157 = vsel %vm156, %v141, %v155
    %vm158 = vcmp.eq.f32.partialorder %v141, 0.0
    %v159 = vand.u32 %v141, 2147483648
    %v160 = vsel %vm158, %v159, %v157
    %v161 = vrsqrt.pop %v142
    %v162 = vmul.f32 %v161, %v142
    %v163 = vmul.f32 %v162, %v161
    %v164 = vmul.f32 0.5, %v163
    %v165 = vsub.f32 1.5, %v164
    %v166 = vmul.f32 %v161, %v165
    %v167 = vmul.f32 %v142, %v166
    %vm168 = vcmp.eq.f32.partialorder %v142, inf
    %v169 = vsel %vm168, %v142, %v167
    %vm170 = vcmp.eq.f32.partialorder %v142, 0.0
    %v171 = vand.u32 %v142, 2147483648
    %v172 = vsel %vm170, %v171, %v169
    %v173 = vmul.f32 %v141, %v160
    %v174 = vmul.f32 %v142, %v172
    %v175 = vmul.f32 %v147, %v173
    %v176 = vmul.f32 %v148, %v174
    %v177 = vadd.f32 %v175, %v176
    %v178 = vld [vmem:[#allocation7] sm:$0xff]
    %v179 = vadd.f32 %v178, %v177
    %180 = vst [vmem:[#allocation7] sm:$0xff] %v179
    // Predicated region
    $region22: #{tpu_custom_call.1} parent=1 // pred_check
      _
    $region23: #{tpu_custom_call.1} parent=1 // pred_check_branch
      %182 = sbr.rel (0) target = $region25
    $region24: #{tpu_custom_call.1} parent=1 // pred_region
      %184 = vsyncadd [#allocation4], 0
      %s186 = sshll.u32 [#allocation7], 4
      %s187 = int_to_ptr.vmem [resolvable:$true] %s186
      %s188 = sshll.u32 %s2, 4
      %s189 = int_to_ptr.hbm [resolvable:$true] %s188
      %191 = dma.vmem_to_hbm [thread:$0]  %s187, 128, %s189, [#allocation4]
    $region25: #{tpu_custom_call.1} parent=1 // pred_fallthru
      _
    // Predicated region
    $region26: #{tpu_custom_call.1} parent=1 // pred_check
      _
    $region27: #{tpu_custom_call.1} parent=1 // pred_check_branch
      %193 = sbr.rel (0) target = $region29
    $region28: #{tpu_custom_call.1} parent=1 // pred_region
      %195 = dma.done [#allocation4], 128
    $region29: #{tpu_custom_call.1} parent=1 // pred_fallthru
      _
    %196 = vsyncpa [#allocation3], 1
    %197 = vsyncpa [#allocation6], 1
    %198 = vsyncpa [#allocation4], 1

</llo_original>
